<compile_context>
chip_gen: v7x
topology: tpu7x:2x2x1
jax: 0.10.0
libtpu: 0.0.40
codegen_flags: <defaults>
</compile_context>

<pallas_src>
import functools

import jax
import jax.numpy as jnp
from jax import lax
from jax.experimental import pallas as pl
from jax.experimental.pallas import tpu as pltpu

_LANES = 128
_BLOCK_ROWS = 4096   # 4096 x 128 x 4 B = 2 MiB per f32 input block
_ACC_ROWS = 64       # (64, 128) f32 accumulator = 8 vregs
_NUM_CORES = 2       # leading "parallel" axis; no-op on single-core chips


def _largest_divisor_leq(x, cap):
    d = min(cap, x)
    while x % d:
        d -= 1
    return d


def _msle_sum_kernel(pred_ref, true_ref, out_ref, acc_ref, *,
                     block_rows, acc_rows, steps_per_core, total_blocks,
                     rows_in_last):
    """Per-core sum of squared log-diffs over this core's row range."""
    c = pl.program_id(0)            # parallel (core-split) axis
    k = pl.program_id(1)            # carried reduction axis
    blk = c * steps_per_core + k    # global block index (may be a clamped dupe)

    @pl.when(k == 0)
    def _():
        acc_ref[...] = jnp.zeros_like(acc_ref)

    one = jnp.float32(1.0 + 1e-10)  # rounds to 1.0f, identical to an f32 torch run

    def sq_log_diff():
        p = pred_ref[...].astype(jnp.float32)
        t = true_ref[...].astype(jnp.float32)
        d = jnp.log(p + one) - jnp.log(t + one)
        return d * d

    def fold(sq):
        # (block_rows, 128) -> (acc_rows, 128) via tile-aligned static slices:
        # pure vreg-to-vreg VPU adds, no XLU / relayout.
        out = sq[0:acc_rows, :]
        for g in range(1, block_rows // acc_rows):
            out = out + sq[g * acc_rows:(g + 1) * acc_rows, :]
        return out

    partial_last = rows_in_last < block_rows
    n_full = total_blocks - 1 if partial_last else total_blocks

    # Hot path: full, in-range blocks — no masking work at all.
    @pl.when(blk < n_full)
    def _():
        acc_ref[...] += fold(sq_log_diff())

    if partial_last:
        # Only the last real block is ragged; mask it here (runs once).
        @pl.when(blk == total_blocks - 1)
        def _():
            row = lax.broadcasted_iota(jnp.int32, (block_rows, _LANES), 0)
            sq = jnp.where(row < rows_in_last, sq_log_diff(), 0.0)
            acc_ref[...] += fold(sq)

    # blk > total_blocks - 1 (clamped duplicate on the short core): contributes 0.

    @pl.when(k == steps_per_core - 1)
    def _():
        out_ref[...] = jnp.sum(acc_ref[...], keepdims=True).reshape(1, 1, 1)


def _msle_sum_pallas(pred2d, true2d):
    """Sum of (log(p+1+eps) - log(t+1+eps))^2 over a (rows, 128) array pair."""
    rows, lanes = pred2d.shape
    assert lanes == _LANES and rows > 0

    block_rows = min(_BLOCK_ROWS, rows)
    acc_rows = _largest_divisor_leq(block_rows, _ACC_ROWS)
    total_blocks = pl.cdiv(rows, block_rows)
    num_cores = min(_NUM_CORES, total_blocks)
    steps_per_core = pl.cdiv(total_blocks, num_cores)
    rows_in_last = rows - (total_blocks - 1) * block_rows

    def in_map(c, k):
        # Clamp so the short core's trailing steps re-point at the last real
        # block (their contribution is skipped in-kernel).
        return (jnp.minimum(c * steps_per_core + k, total_blocks - 1), 0)

    kernel = functools.partial(
        _msle_sum_kernel,
        block_rows=block_rows, acc_rows=acc_rows,
        steps_per_core=steps_per_core, total_blocks=total_blocks,
        rows_in_last=rows_in_last)

    n_main = rows * _LANES
    itemsize = jnp.dtype(pred2d.dtype).itemsize
    cost = pl.CostEstimate(
        flops=5 * n_main,
        transcendentals=2 * n_main,
        bytes_accessed=2 * n_main * itemsize)

    partials = pl.pallas_call(
        kernel,
        out_shape=jax.ShapeDtypeStruct((num_cores, 1, 1), jnp.float32),
        grid_spec=pltpu.PrefetchScalarGridSpec(
            num_scalar_prefetch=0,
            grid=(num_cores, steps_per_core),
            in_specs=[
                pl.BlockSpec((block_rows, _LANES), in_map),
                pl.BlockSpec((block_rows, _LANES), in_map),
            ],
            out_specs=pl.BlockSpec((1, 1, 1), lambda c, k: (c, 0, 0)),
            scratch_shapes=[pltpu.VMEM((acc_rows, _LANES), jnp.float32)],
        ),
        compiler_params=pltpu.CompilerParams(
            dimension_semantics=("parallel", "arbitrary"),
            vmem_limit_bytes=32 * 1024 * 1024,
        ),
        cost_estimate=cost,
    )(pred2d, true2d)
    return jnp.sum(partials)


def msle_loss(y_pred, y_true):
    """Pallas-backed MSLE loss. Returns a float32 scalar."""
    assert y_pred.shape == y_true.shape, "shapes must match (no broadcasting used)"
    n = int(y_pred.size)
    assert n > 0

    pf = jnp.ravel(y_pred)
    tf = jnp.ravel(y_true)

    one = jnp.float32(1.0 + 1e-10)
    total = jnp.float32(0.0)

    rows = n // _LANES
    tail = n - rows * _LANES

    if tail:
        # < 128 trailing elements: plain JAX (cheaper than an HBM-copying pad).
        tp = pf[rows * _LANES:].astype(jnp.float32)
        tt = tf[rows * _LANES:].astype(jnp.float32)
        d = jnp.log(tp + one) - jnp.log(tt + one)
        total = total + jnp.sum(d * d)

    if rows:
        if tail:
            pm = pf[:rows * _LANES].reshape(rows, _LANES)
            tm = tf[:rows * _LANES].reshape(rows, _LANES)
        else:
            pm = pf.reshape(rows, _LANES)
            tm = tf.reshape(rows, _LANES)
        total = total + _msle_sum_pallas(pm, tm)

    return total / n


def msle_loss_ref(y_pred, y_true):
    """Pure-JAX reference matching the PyTorch module."""
    eps = 1e-10
    d = jnp.log(y_pred.astype(jnp.float32) + 1 + eps) - jnp.log(
        y_true.astype(jnp.float32) + 1 + eps
    )
    return jnp.mean(d * d)


if __name__ == "__main__":
    # MSLELoss has no parameters; build deterministic positive inputs.
    key = jax.random.PRNGKey(0)
    k1, k2 = jax.random.split(key)
    shape = (2, 4, 16, 16)  # batch=2, channels=4, spatial=16x16
    y_pred = jax.random.uniform(k1, shape, dtype=jnp.float32, minval=0.0, maxval=10.0)
    y_true = jax.random.uniform(k2, shape, dtype=jnp.float32, minval=0.0, maxval=10.0)

    loss = msle_loss(y_pred, y_true)
    loss = jax.block_until_ready(loss)

    ref = msle_loss_ref(y_pred, y_true)
    assert jnp.allclose(loss, ref, rtol=1e-5, atol=1e-6), (loss, ref)
    print("KERNEL_OK")
</pallas_src>

<mosaic_0001>
module attributes {stable_mosaic.version = 11 : i64} {
  func.func @_msle_sum_kernel(%arg0: i32, %arg1: i32, %arg2: memref<16x128xf32, #tpu.memory_space<vmem>>, %arg3: memref<16x128xf32, #tpu.memory_space<vmem>>, %arg4: memref<1x1x1xf32, #tpu.memory_space<vmem>>, %arg5: memref<16x128xf32, #tpu.memory_space<vmem>>) attributes {dimension_semantics = [#tpu.dimension_semantics<parallel>, #tpu.dimension_semantics<arbitrary>], iteration_bounds = array<i64: 1, 1>, scalar_prefetch = 0 : i64, scratch_operands = 1 : i64, tpu.core_type = #tpu.core_type<tc>, window_params = [{transform_indices = @transform_0, window_bounds = array<i64: 16, 128>}, {transform_indices = @transform_1, window_bounds = array<i64: 16, 128>}, {transform_indices = @transform_2, window_bounds = array<i64: 1, 1, 1>}]} {
    %c1_i32 = arith.constant 1 : i32
    %0 = arith.muli %arg0, %c1_i32 : i32
    %1 = arith.addi %0, %arg1 : i32
    %c0_i32 = arith.constant 0 : i32
    %2 = arith.cmpi eq, %arg1, %c0_i32 : i32
    %3 = arith.extui %2 : i1 to i32
    %c0_i32_0 = arith.constant 0 : i32
    %4 = arith.cmpi ne, %3, %c0_i32_0 : i32
    scf.if %4 {
      %cst_5 = arith.constant 0.000000e+00 : f32
      %11 = vector.broadcast %cst_5 : f32 to vector<16x128xf32>
      %c0 = arith.constant 0 : index
      %c0_6 = arith.constant 0 : index
      %12 = vector.load %arg5[%c0, %c0_6] : memref<16x128xf32, #tpu.memory_space<vmem>>, vector<16x128xf32>
      tpu.vector_store %arg5[%c0, %c0_6], %11 {strides = array<i32>} : memref<16x128xf32, #tpu.memory_space<vmem>>, vector<16x128xf32>,
    } else {
    }
    %c1_i32_1 = arith.constant 1 : i32
    %5 = arith.cmpi slt, %1, %c1_i32_1 : i32
    %6 = arith.extui %5 : i1 to i32
    %cst = arith.constant 1.000000e+00 : f32
    %c0_i32_2 = arith.constant 0 : i32
    %7 = arith.cmpi ne, %6, %c0_i32_2 : i32
    scf.if %7 {
      %c0 = arith.constant 0 : index
      %c0_5 = arith.constant 0 : index
      %11 = vector.load %arg5[%c0, %c0_5] : memref<16x128xf32, #tpu.memory_space<vmem>>, vector<16x128xf32>
      %c0_6 = arith.constant 0 : index
      %c0_7 = arith.constant 0 : index
      %12 = vector.load %arg2[%c0_6, %c0_7] : memref<16x128xf32, #tpu.memory_space<vmem>>, vector<16x128xf32>
      %c0_8 = arith.constant 0 : index
      %c0_9 = arith.constant 0 : index
      %13 = vector.load %arg3[%c0_8, %c0_9] : memref<16x128xf32, #tpu.memory_space<vmem>>, vector<16x128xf32>
      %14 = vector.broadcast %cst : f32 to vector<16x128xf32>
      %15 = arith.addf %12, %14 : vector<16x128xf32>
      %16 = math.log %15 : vector<16x128xf32>
      %17 = vector.broadcast %cst : f32 to vector<16x128xf32>
      %18 = arith.addf %13, %17 : vector<16x128xf32>
      %19 = math.log %18 : vector<16x128xf32>
      %20 = arith.subf %16, %19 : vector<16x128xf32>
      %21 = arith.mulf %20, %20 : vector<16x128xf32>
      %22 = arith.addf %11, %21 : vector<16x128xf32>
      %c0_10 = arith.constant 0 : index
      %c0_11 = arith.constant 0 : index
      %23 = vector.load %arg5[%c0_10, %c0_11] : memref<16x128xf32, #tpu.memory_space<vmem>>, vector<16x128xf32>
      tpu.vector_store %arg5[%c0_10, %c0_11], %22 {strides = array<i32>} : memref<16x128xf32, #tpu.memory_space<vmem>>, vector<16x128xf32>,
    } else {
    }
    %c0_i32_3 = arith.constant 0 : i32
    %8 = arith.cmpi eq, %arg1, %c0_i32_3 : i32
    %9 = arith.extui %8 : i1 to i32
    %c0_i32_4 = arith.constant 0 : i32
    %10 = arith.cmpi ne, %9, %c0_i32_4 : i32
    scf.if %10 {
      %c0 = arith.constant 0 : index
      %c0_5 = arith.constant 0 : index
      %11 = vector.load %arg5[%c0, %c0_5] : memref<16x128xf32, #tpu.memory_space<vmem>>, vector<16x128xf32>
      %12 = vector.shape_cast %11 : vector<16x128xf32> to vector<1x16x128xf32>
      %cst_6 = arith.constant dense<0.000000e+00> : vector<1xf32>
      %13 = vector.multi_reduction <add>, %12, %cst_6 [1, 2] : vector<1x16x128xf32> to vector<1xf32>
      %14 = vector.shape_cast %13 : vector<1xf32> to vector<1x1x1xf32>
      %15 = vector.extract %14[0, 0, 0] : f32 from vector<1x1x1xf32>
      %16 = vector.broadcast %15 : f32 to vector<1x1xf32>
      %17 = vector.shape_cast %16 : vector<1x1xf32> to vector<1x1x1xf32>
      %c0_7 = arith.constant 0 : index
      %c0_8 = arith.constant 0 : index
      %c0_9 = arith.constant 0 : index
      %18 = vector.load %arg4[%c0_7, %c0_8, %c0_9] : memref<1x1x1xf32, #tpu.memory_space<vmem>>, vector<1x1x1xf32>
      tpu.vector_store %arg4[%c0_7, %c0_8, %c0_9], %17 {strides = array<i32>} : memref<1x1x1xf32, #tpu.memory_space<vmem>>, vector<1x1x1xf32>,
    } else {
    }
    return
  }
  func.func @transform_0(%arg0: i32, %arg1: i32) -> (i32, i32) {
    %c1_i32 = arith.constant 1 : i32
    %0 = arith.muli %arg0, %c1_i32 : i32
    %1 = arith.addi %0, %arg1 : i32
    %c0_i32 = arith.constant 0 : i32
    %2 = arith.minsi %1, %c0_i32 : i32
    %c0_i32_0 = arith.constant 0 : i32
    %c0_i32_1 = arith.constant 0 : i32
    return %2, %c0_i32_0 : i32, i32
  }
  func.func @transform_1(%arg0: i32, %arg1: i32) -> (i32, i32) {
    %c1_i32 = arith.constant 1 : i32
    %0 = arith.muli %arg0, %c1_i32 : i32
    %1 = arith.addi %0, %arg1 : i32
    %c0_i32 = arith.constant 0 : i32
    %2 = arith.minsi %1, %c0_i32 : i32
    %c0_i32_0 = arith.constant 0 : i32
    %c0_i32_1 = arith.constant 0 : i32
    return %2, %c0_i32_0 : i32, i32
  }
  func.func @transform_2(%arg0: i32, %arg1: i32) -> (i32, i32, i32) {
    %c0_i32 = arith.constant 0 : i32
    %c0_i32_0 = arith.constant 0 : i32
    %c0_i32_1 = arith.constant 0 : i32
    return %arg0, %c0_i32, %c0_i32_0 : i32, i32, i32
  }
}

</mosaic_0001>

<llo_original>
// kernel: tpu_custom_call.1
$region0: #{tpu_custom_call.1}
  #allocation0 [shape = 'u32[]', space=smem, size = 0x4, offset = 0x4, fixed_abs, tag = 'smem constant byte address 0x4 - core index']
  #allocation1 [shape = 'u32[144,128]{1,0:T(1,128)}', space=vmem, size = 0x12000, scoped, tag = 'internal scratch']
  #allocation2 [shape = 'f32[16,128]{1,0:T(8,128)}', space=vmem, size = 0x2000, scoped, tag = 'scratch operand']
  %s0 = inlined_call_operand.hbm [shape: f32[16,128], index: 0, kind: input, shape index: {}]
  %s1 = inlined_call_operand.hbm [shape: f32[16,128], index: 1, kind: input, shape index: {}]
  %s2 = inlined_call_operand.hbm [shape: f32[1,1,1], index: 2, kind: output, shape index: {}]
  %s3 = sld [smem:[#allocation0]]
  $region38: #{tpu_custom_call.1} parent=0
    _
  %s5 = ssub.s32 1, %s3
  %s6 = scalar_select 0, %s5, %s3
  $region1: #{tpu_custom_call.1} parent=0
    #allocation3 [shape = 'u8[8192]{0}', space=vmem, size = 0x2000, scoped, tag = 'input window, operand 0, single buffered']
    #allocation4 [shape = 's32[1]{0}', space=sflag, size = 0x4, scoped, tag = 'scoped memory for tpu_custom_call.1']
    #allocation5 [shape = 's32[1]{0}', space=sflag, size = 0x4, scoped, tag = 'scoped memory for tpu_custom_call.1']
    #allocation6 [shape = 'u8[8192]{0}', space=vmem, size = 0x2000, scoped, tag = 'input window, operand 1, single buffered']
    #allocation7 [shape = 's32[1]{0}', space=sflag, size = 0x4, scoped, tag = 'scoped memory for tpu_custom_call.1']
    #allocation8 [shape = 'u8[512]{0}', space=vmem, size = 0x400, scoped, tag = 'output window, operand 0, single buffered']
    %7 = vsyncpa [#allocation4], 0
    %8 = vsyncpa [#allocation7], 0
    %9 = vsyncpa [#allocation5], 0
    // Predicated region
    $region2: #{tpu_custom_call.1} parent=1 // pred_check
      _
    $region3: #{tpu_custom_call.1} parent=1 // pred_check_branch
      %11 = sbr.rel (0) target = $region5
    $region4: #{tpu_custom_call.1} parent=1 // pred_region
      %s12 = sadd.s32 0, 0
      %p13 = scmp.lt.s32.totalorder %s12, 0
      %s14 = scalar_select %p13, %s12, 0
      %s15 = smul.u32 2, %s14
      %s17 = ssub.s32 256, 256
      %18 = vsyncadd [#allocation4], %s17
      %s19 = smul.addr %s15, 128
      %s20 = scalar_lea.hbm %s0, %s19
      %s21 = sshll.u32 [#allocation3], 4
      %s22 = int_to_ptr.vmem [resolvable:$true] %s21
      %27 = dma.hbm_to_vmem [thread:$0]  %s20, 256, %s22, [#allocation4], 128, 128, 8
    $region5: #{tpu_custom_call.1} parent=1 // pred_fallthru
      _
    // Predicated region
    $region6: #{tpu_custom_call.1} parent=1 // pred_check
      _
    $region7: #{tpu_custom_call.1} parent=1 // pred_check_branch
      %29 = sbr.rel (0) target = $region9
    $region8: #{tpu_custom_call.1} parent=1 // pred_region
      %s30 = sadd.s32 0, 0
      %p31 = scmp.lt.s32.totalorder %s30, 0
      %s32 = scalar_select %p31, %s30, 0
      %s33 = smul.u32 2, %s32
      %s35 = ssub.s32 256, 256
      %36 = vsyncadd [#allocation7], %s35
      %s37 = smul.addr %s33, 128
      %s38 = scalar_lea.hbm %s1, %s37
      %s39 = sshll.u32 [#allocation6], 4
      %s40 = int_to_ptr.vmem [resolvable:$true] %s39
      %45 = dma.hbm_to_vmem [thread:$0]  %s38, 256, %s40, [#allocation7], 128, 128, 8
    $region9: #{tpu_custom_call.1} parent=1 // pred_fallthru
      _
    // Predicated region
    $region10: #{tpu_custom_call.1} parent=1 // pred_check
      _
    $region11: #{tpu_custom_call.1} parent=1 // pred_check_branch
      %47 = sbr.rel (0) target = $region13
    $region12: #{tpu_custom_call.1} parent=1 // pred_region
      %48 = dma.done [#allocation4], 256
    $region13: #{tpu_custom_call.1} parent=1 // pred_fallthru
      _
    // Predicated region
    $region14: #{tpu_custom_call.1} parent=1 // pred_check
      _
    $region15: #{tpu_custom_call.1} parent=1 // pred_check_branch
      %50 = sbr.rel (0) target = $region17
    $region16: #{tpu_custom_call.1} parent=1 // pred_region
      %51 = dma.done [#allocation7], 256
    $region17: #{tpu_custom_call.1} parent=1 // pred_fallthru
      _
    %s52 = sadd.s32 0, 0
    %p53 = scmp.lt.s32.totalorder %s52, 0
    %s54 = scalar_select %p53, %s52, 0
    %s55 = smul.u32 2, %s54
    %s56 = sadd.s32 0, 0
    %p57 = scmp.lt.s32.totalorder %s56, 0
    %s58 = scalar_select %p57, %s56, 0
    %s59 = smul.u32 2, %s58
    %s60 = sadd.s32 0, 0
    %p61 = scmp.eq.s32.totalorder 0, 0
    // Predicated region
    $region18: #{tpu_custom_call.1} parent=1 // pred_check
      %p62 = pneg %p61
    $region19: #{tpu_custom_call.1} parent=1 // pred_check_branch
      %64 = sbr.rel (%p62) target = $region21
    $region20: #{tpu_custom_call.1} parent=1 // pred_region
      %65 = vst [vmem:[#allocation2] sm:$0xff] 0.0
      %66 = vst [vmem:[#allocation2 + $0x8] sm:$0xff] 0.0
    $region21: #{tpu_custom_call.1} parent=1 // pred_fallthru
      _
    %p67 = scmp.lt.s32.totalorder %s60, 1
    // Predicated region
    $region22: #{tpu_custom_call.1} parent=1 // pred_check
      %p68 = pneg %p67
    $region23: #{tpu_custom_call.1} parent=1 // pred_check_branch
      %70 = sbr.rel (%p68) target = $region25
    $region24: #{tpu_custom_call.1} parent=1 // pred_region
      %v71 = vld [vmem:[#allocation2] sm:$0xff]
      %v72 = vld [vmem:[#allocation2 + $0x8] sm:$0xff]
      %v73 = vld [vmem:[#allocation3] sm:$0xff]
      %v74 = vld [vmem:[#allocation3 + $0x8] sm:$0xff]
      %v75 = vld [vmem:[#allocation6] sm:$0xff]
      %v76 = vld [vmem:[#allocation6 + $0x8] sm:$0xff]
      %v77 = vadd.f32 %v73, 1.0
      %v78 = vadd.f32 %v74, 1.0
      %v79 = vlog2.pop %v77
      %v80 = vmul.f32 %v79, 0.6931472
      %v81 = vlog2.pop %v78
      %v82 = vmul.f32 %v81, 0.6931472
      %v83 = vadd.f32 %v75, 1.0
      %v84 = vadd.f32 %v76, 1.0
      %v85 = vlog2.pop %v83
      %v86 = vmul.f32 %v85, 0.6931472
      %v87 = vlog2.pop %v84
      %v88 = vmul.f32 %v87, 0.6931472
      %v89 = vsub.f32 %v80, %v86
      %v90 = vsub.f32 %v82, %v88
      %v91 = vmul.f32 %v89, %v89
      %v92 = vmul.f32 %v90, %v90
      %v93 = vadd.f32 %v71, %v91
      %v94 = vadd.f32 %v72, %v92
      %95 = vst [vmem:[#allocation2] sm:$0xff] %v93
      %96 = vst [vmem:[#allocation2 + $0x8] sm:$0xff] %v94
    $region25: #{tpu_custom_call.1} parent=1 // pred_fallthru
      _
    // Predicated region
    $region26: #{tpu_custom_call.1} parent=1 // pred_check
      %p97 = pneg %p61
    $region27: #{tpu_custom_call.1} parent=1 // pred_check_branch
      %99 = sbr.rel (%p97) target = $region29
    $region28: #{tpu_custom_call.1} parent=1 // pred_region
      %v100 = vld [vmem:[#allocation2] sm:$0xff]
      %v101 = vld [vmem:[#allocation2 + $0x8] sm:$0xff]
      %v102 = vadd.f32 %v100, %v101
      %103 = vadd.xlane.f32.xlu0 %v102
      %v104 = vpop.xlane.xlu0 %103
      %v105 = vrot.slane %v104, 4
      %v106 = vadd.f32 %v104, %v105
      %v107 = vrot.slane %v106, 2
      %v108 = vadd.f32 %v106, %v107
      %v109 = vrot.slane %v108, 1
      %v110 = vadd.f32 %v108, %v109
      %s111 = vtos %v110
      %v112 = vstv %s111
      %vm113 = vcmask 0
      %114 = vst.msk [vmem:[#allocation8] sm:$0x1] %vm113, %v112
    $region29: #{tpu_custom_call.1} parent=1 // pred_fallthru
      _
    // Predicated region
    $region30: #{tpu_custom_call.1} parent=1 // pred_check
      _
    $region31: #{tpu_custom_call.1} parent=1 // pred_check_branch
      %116 = sbr.rel (0) target = $region33
    $region32: #{tpu_custom_call.1} parent=1 // pred_region
      %s118 = ssub.s32 16, 16
      %119 = vsyncadd [#allocation5], %s118
      %s121 = sshll.u32 [#allocation8], 4
      %s122 = int_to_ptr.vmem [resolvable:$true] %s121
      %124 = dma.vmem_to_hbm [thread:$0]  %s122, 16, %s2, [#allocation5]
    $region33: #{tpu_custom_call.1} parent=1 // pred_fallthru
      _
    // Predicated region
    $region34: #{tpu_custom_call.1} parent=1 // pred_check
      _
    $region35: #{tpu_custom_call.1} parent=1 // pred_check_branch
      %126 = sbr.rel (0) target = $region37
    $region36: #{tpu_custom_call.1} parent=1 // pred_region
      %127 = dma.done [#allocation5], 16
    $region37: #{tpu_custom_call.1} parent=1 // pred_fallthru
      _
    %128 = vsyncpa [#allocation4], 1
    %129 = vsyncpa [#allocation7], 1
    %130 = vsyncpa [#allocation5], 1

</llo_original>
